<compile_context>
chip_gen: v6e
topology: v6e:2x2x1
jax: 0.10.0
libtpu: 0.0.40
codegen_flags: <defaults>
</compile_context>

<pallas_src>
import functools

import jax
import jax.numpy as jnp
from jax.experimental import pallas as pl
from jax.experimental.pallas import tpu as pltpu

LN_EPS = 1e-5  # torch.nn.LayerNorm default


def _round_up(x, m):
    return (x + m - 1) // m * m


def _vmem_budget_bytes():
    """Conservative per-call VMEM budget, safe on every TPU generation."""
    try:
        cap = pltpu.get_tpu_info().vmem_capacity_bytes  # 64 MiB v7x, 128 MiB v5e/v6e
    except Exception:
        cap = 64 * 1024 * 1024  # assume the smallest (v7x) if the query fails
    return min(cap // 4, 16 * 1024 * 1024)


def _pick_tile_rows(batch, hp, itemsize):
    """Batch-tile rows: large enough to fill MXU rows / hide DMA, small enough for VMEM."""
    budget = _vmem_budget_bytes()
    # weights / LN params (double-buffered by the pipeline)
    param_bytes = 2 * (3 * hp * hp + 8 * hp) * itemsize
    # per batch-row: x + out double-buffered, plus ~4 live f32 HP-wide temporaries
    per_row = (2 + 2) * hp * itemsize + 4 * hp * 4
    tb = (budget - param_bytes) // max(per_row, 1)
    tb = min(tb, 1024, _round_up(batch, 8))
    return max(8, (tb // 8) * 8)


def editor_kernel(
    x_ref,
    w1_ref, b1_ref, g1_ref, be1_ref,
    w2_ref, b2_ref, g2_ref, be2_ref,
    w3_ref, b3_ref,
    o_ref,
    *, valid,
):
    """One branch, one batch tile: Linear->LN->ReLU->Linear->LN->ReLU->Linear->tanh.

    All refs carry a leading branch dim of 1.  `valid` is the real (unpadded)
    feature count; LayerNorm statistics are masked to it.
    """
    hp = x_ref.shape[-1]
    x = x_ref[0]  # (TB, HP) in its native dtype (no forced f32 up-cast before the MXU)

    if valid == hp:
        mask = None
    else:
        lane = jax.lax.broadcasted_iota(jnp.int32, (1, hp), 1)
        mask = (lane < valid).astype(jnp.float32)
    inv_n = jnp.float32(1.0 / valid)

    def layernorm(h, g_ref, b_ref):
        # h: (TB, HP) f32; gamma/beta rows: (1, HP).  Padded gamma/beta columns
        # are 0, so padded output lanes stay exactly 0.
        g = g_ref[0].astype(jnp.float32)
        b = b_ref[0].astype(jnp.float32)
        if mask is None:
            mean = jnp.mean(h, axis=-1, keepdims=True)
            c = h - mean
            var = jnp.mean(c * c, axis=-1, keepdims=True)
        else:
            mean = jnp.sum(h * mask, axis=-1, keepdims=True) * inv_n
            c = h - mean
            cm = c * mask
            var = jnp.sum(cm * cm, axis=-1, keepdims=True) * inv_n
        return c * jax.lax.rsqrt(var + LN_EPS) * g + b

    def dot_bias(a, w_ref, b_ref):
        w = w_ref[0]
        # MXU in the weight dtype, f32 accumulation.
        return (jnp.dot(a.astype(w.dtype), w, preferred_element_type=jnp.float32)
                + b_ref[0].astype(jnp.float32))

    h = dot_bias(x, w1_ref, b1_ref)
    h = jnp.maximum(layernorm(h, g1_ref, be1_ref), 0.0)
    h = dot_bias(h, w2_ref, b2_ref)
    h = jnp.maximum(layernorm(h, g2_ref, be2_ref), 0.0)
    h = dot_bias(h, w3_ref, b3_ref)
    o_ref[0] = jnp.tanh(h).astype(o_ref.dtype)


def _pad_branch_params(params, hp):
    """Zero-pad one branch's parameters to the lane-padded feature width."""
    w1, b1, g1, be1, w2, b2, g2, be2, w3, b3 = params

    def pw(w):   # (H_in, H_out) -> (hp, hp), zero pad
        return jnp.pad(w, ((0, hp - w.shape[0]), (0, hp - w.shape[1])))

    def pr(r):   # (1, H) -> (1, hp), zero pad (gamma pad = 0 keeps padded lanes at 0)
        return jnp.pad(r, ((0, 0), (0, hp - r.shape[1])))

    return (pw(w1), pr(b1), pr(g1), pr(be1),
            pw(w2), pr(b2), pr(g2), pr(be2),
            pw(w3), pr(b3))


def editor_forward(user_feature, item_feature, user_params, item_params):
    """Fused forward: both Editor branches in one pallas_call.

    Linear weights are expected pre-transposed as (in_features, out_features)
    so the kernel computes x @ W_t + b == PyTorch's x @ W.T + b.
    LayerNorm params / biases are (1, hidden) rows.
    """
    assert user_feature.shape == item_feature.shape
    B, H = user_feature.shape
    HP = _round_up(H, 128)                                   # lane-dense feature width
    TB = _pick_tile_rows(B, HP, jnp.dtype(user_feature.dtype).itemsize)
    Bp = _round_up(B, TB)

    def pad_x(x):
        return jnp.pad(x, ((0, Bp - B), (0, HP - H)))

    x = jnp.stack([pad_x(user_feature), pad_x(item_feature)])        # (2, Bp, HP)
    params = [jnp.stack(pair)
              for pair in zip(_pad_branch_params(user_params, HP),
                              _pad_branch_params(item_params, HP))]   # each (2, ..., HP)

    grid = (2, Bp // TB)  # branch outer -> weight blocks resident across batch tiles

    x_spec = pl.BlockSpec((1, TB, HP), lambda e, i: (e, i, 0))
    mat_spec = pl.BlockSpec((1, HP, HP), lambda e, i: (e, 0, 0))
    row_spec = pl.BlockSpec((1, 1, HP), lambda e, i: (e, 0, 0))
    in_specs = [
        x_spec,
        mat_spec, row_spec, row_spec, row_spec,   # w1, b1, gamma1, beta1
        mat_spec, row_spec, row_spec, row_spec,   # w2, b2, gamma2, beta2
        mat_spec, row_spec,                       # w3, b3
    ]

    out = pl.pallas_call(
        functools.partial(editor_kernel, valid=H),
        out_shape=jax.ShapeDtypeStruct((2, Bp, HP), user_feature.dtype),
        grid_spec=pltpu.PrefetchScalarGridSpec(
            num_scalar_prefetch=0,
            grid=grid,
            in_specs=in_specs,
            out_specs=pl.BlockSpec((1, TB, HP), lambda e, i: (e, i, 0)),
        ),
        compiler_params=pltpu.CompilerParams(
            dimension_semantics=("parallel", "parallel"),
            vmem_limit_bytes=32 * 1024 * 1024,
        ),
    )(x, *params)

    return out[0, :B, :H], out[1, :B, :H]


def init_branch_params(key, hidden_size):
    """Matches Editor.init_weights(): Linear.weight ~ N(0, 0.02), Linear.bias = 0,
       LayerNorm gamma = 1, beta = 0."""
    k1, k2, k3 = jax.random.split(key, 3)
    H = hidden_size

    def lin(k):
        w = 0.02 * jax.random.normal(k, (H, H), dtype=jnp.float32)  # torch (out, in)
        return w.T, jnp.zeros((1, H), dtype=jnp.float32)            # kernel wants (in, out)

    w1, b1 = lin(k1)
    w2, b2 = lin(k2)
    w3, b3 = lin(k3)
    gamma = jnp.ones((1, H), dtype=jnp.float32)
    beta = jnp.zeros((1, H), dtype=jnp.float32)
    return (w1, b1, gamma, beta,
            w2, b2, gamma, beta,
            w3, b3)


def _reference_branch(x, params):
    """Pure-JAX reference of the same MLP (correctness check)."""
    (w1, b1, g1, be1, w2, b2, g2, be2, w3, b3) = params

    def ln(h, g, b):
        m = jnp.mean(h, axis=-1, keepdims=True)
        v = jnp.mean((h - m) ** 2, axis=-1, keepdims=True)
        return (h - m) / jnp.sqrt(v + LN_EPS) * g + b

    h = jnp.maximum(ln(x @ w1 + b1, g1, be1), 0.0)
    h = jnp.maximum(ln(h @ w2 + b2, g2, be2), 0.0)
    return jnp.tanh(h @ w3 + b3)


if __name__ == "__main__":
    hidden_size = 32
    batch = 8

    key = jax.random.PRNGKey(0)
    k_user_p, k_item_p, k_user_x, k_item_x = jax.random.split(key, 4)

    user_params = init_branch_params(k_user_p, hidden_size)
    item_params = init_branch_params(k_item_p, hidden_size)

    user_feature = jax.random.normal(k_user_x, (batch, hidden_size), dtype=jnp.float32)
    item_feature = jax.random.normal(k_item_x, (batch, hidden_size), dtype=jnp.float32)

    fwd = jax.jit(editor_forward)
    user_edited, item_edited = fwd(user_feature, item_feature, user_params, item_params)
    jax.block_until_ready((user_edited, item_edited))

    # correctness check against pure-JAX reference
    ref_u = _reference_branch(user_feature, user_params)
    ref_i = _reference_branch(item_feature, item_params)
    assert user_edited.shape == (batch, hidden_size)
    assert item_edited.shape == (batch, hidden_size)
    assert jnp.allclose(user_edited, ref_u, atol=2e-5, rtol=2e-5)
    assert jnp.allclose(item_edited, ref_i, atol=2e-5, rtol=2e-5)

    print("KERNEL_OK")
</pallas_src>

<mosaic_0001>
module attributes {stable_mosaic.version = 11 : i64} {
  func.func @editor_kernel(%arg0: i32, %arg1: i32, %arg2: memref<1x8x128xf32, #tpu.memory_space<vmem>>, %arg3: memref<1x128x128xf32, #tpu.memory_space<vmem>>, %arg4: memref<1x1x128xf32, #tpu.memory_space<vmem>>, %arg5: memref<1x1x128xf32, #tpu.memory_space<vmem>>, %arg6: memref<1x1x128xf32, #tpu.memory_space<vmem>>, %arg7: memref<1x128x128xf32, #tpu.memory_space<vmem>>, %arg8: memref<1x1x128xf32, #tpu.memory_space<vmem>>, %arg9: memref<1x1x128xf32, #tpu.memory_space<vmem>>, %arg10: memref<1x1x128xf32, #tpu.memory_space<vmem>>, %arg11: memref<1x128x128xf32, #tpu.memory_space<vmem>>, %arg12: memref<1x1x128xf32, #tpu.memory_space<vmem>>, %arg13: memref<1x8x128xf32, #tpu.memory_space<vmem>>) attributes {dimension_semantics = [#tpu.dimension_semantics<parallel>, #tpu.dimension_semantics<parallel>], iteration_bounds = array<i64: 2, 1>, scalar_prefetch = 0 : i64, scratch_operands = 0 : i64, tpu.core_type = #tpu.core_type<tc>, window_params = [{transform_indices = @transform_0, window_bounds = array<i64: 1, 8, 128>}, {transform_indices = @transform_1, window_bounds = array<i64: 1, 128, 128>}, {transform_indices = @transform_2, window_bounds = array<i64: 1, 1, 128>}, {transform_indices = @transform_3, window_bounds = array<i64: 1, 1, 128>}, {transform_indices = @transform_4, window_bounds = array<i64: 1, 1, 128>}, {transform_indices = @transform_5, window_bounds = array<i64: 1, 128, 128>}, {transform_indices = @transform_6, window_bounds = array<i64: 1, 1, 128>}, {transform_indices = @transform_7, window_bounds = array<i64: 1, 1, 128>}, {transform_indices = @transform_8, window_bounds = array<i64: 1, 1, 128>}, {transform_indices = @transform_9, window_bounds = array<i64: 1, 128, 128>}, {transform_indices = @transform_10, window_bounds = array<i64: 1, 1, 128>}, {transform_indices = @transform_11, window_bounds = array<i64: 1, 8, 128>}]} {
    %c0 = arith.constant 0 : index
    %c0_0 = arith.constant 0 : index
    %c0_1 = arith.constant 0 : index
    %0 = vector.load %arg2[%c0, %c0_0, %c0_1] : memref<1x8x128xf32, #tpu.memory_space<vmem>>, vector<1x8x128xf32>
    %1 = vector.shape_cast %0 : vector<1x8x128xf32> to vector<8x128xf32>
    %2 = tpu.iota {dimensions = array<i32: 1>} : vector<1x128xi32>
    %c32_i32 = arith.constant 32 : i32
    %3 = vector.broadcast %c32_i32 : i32 to vector<1x128xi32>
    %4 = arith.cmpi slt, %2, %3 : vector<1x128xi32>
    %5 = arith.extui %4 : vector<1x128xi1> to vector<1x128xi32>
    %6 = arith.sitofp %5 : vector<1x128xi32> to vector<1x128xf32>
    %c0_2 = arith.constant 0 : index
    %c0_3 = arith.constant 0 : index
    %c0_4 = arith.constant 0 : index
    %7 = vector.load %arg3[%c0_2, %c0_3, %c0_4] : memref<1x128x128xf32, #tpu.memory_space<vmem>>, vector<1x128x128xf32>
    %8 = vector.shape_cast %7 : vector<1x128x128xf32> to vector<128x128xf32>
    %cst = arith.constant dense<0.000000e+00> : vector<8x128xf32>
    %9 = tpu.matmul %1, %8, %cst {dimension_numbers = #tpu.dot_dimension_numbers<[1], [0], [0], [1], [0, 0, 1, 1], [], []>} : vector<8x128xf32>, vector<128x128xf32>, vector<8x128xf32> -> vector<8x128xf32>
    %c0_5 = arith.constant 0 : index
    %c0_6 = arith.constant 0 : index
    %c0_7 = arith.constant 0 : index
    %10 = vector.load %arg4[%c0_5, %c0_6, %c0_7] : memref<1x1x128xf32, #tpu.memory_space<vmem>>, vector<1x1x128xf32>
    %11 = vector.shape_cast %10 : vector<1x1x128xf32> to vector<1x128xf32>
    %12 = vector.broadcast %11 : vector<1x128xf32> to vector<8x128xf32>
    %13 = arith.addf %9, %12 : vector<8x128xf32>
    %c0_8 = arith.constant 0 : index
    %c0_9 = arith.constant 0 : index
    %c0_10 = arith.constant 0 : index
    %14 = vector.load %arg5[%c0_8, %c0_9, %c0_10] : memref<1x1x128xf32, #tpu.memory_space<vmem>>, vector<1x1x128xf32>
    %15 = vector.shape_cast %14 : vector<1x1x128xf32> to vector<1x128xf32>
    %c0_11 = arith.constant 0 : index
    %c0_12 = arith.constant 0 : index
    %c0_13 = arith.constant 0 : index
    %16 = vector.load %arg6[%c0_11, %c0_12, %c0_13] : memref<1x1x128xf32, #tpu.memory_space<vmem>>, vector<1x1x128xf32>
    %17 = vector.shape_cast %16 : vector<1x1x128xf32> to vector<1x128xf32>
    %18 = vector.broadcast %6 : vector<1x128xf32> to vector<8x128xf32>
    %19 = arith.mulf %13, %18 : vector<8x128xf32>
    %cst_14 = arith.constant dense<0.000000e+00> : vector<8xf32>
    %20 = vector.multi_reduction <add>, %19, %cst_14 [1] : vector<8x128xf32> to vector<8xf32>
    %21 = vector.shape_cast %20 : vector<8xf32> to vector<8x1xf32>
    %cst_15 = arith.constant 3.125000e-02 : f32
    %22 = vector.broadcast %cst_15 : f32 to vector<8x1xf32>
    %23 = arith.mulf %21, %22 : vector<8x1xf32>
    %24 = vector.broadcast %23 : vector<8x1xf32> to vector<8x128xf32>
    %25 = arith.subf %13, %24 : vector<8x128xf32>
    %26 = vector.broadcast %6 : vector<1x128xf32> to vector<8x128xf32>
    %27 = arith.mulf %25, %26 : vector<8x128xf32>
    %28 = arith.mulf %27, %27 : vector<8x128xf32>
    %cst_16 = arith.constant dense<0.000000e+00> : vector<8xf32>
    %29 = vector.multi_reduction <add>, %28, %cst_16 [1] : vector<8x128xf32> to vector<8xf32>
    %30 = vector.shape_cast %29 : vector<8xf32> to vector<8x1xf32>
    %cst_17 = arith.constant 3.125000e-02 : f32
    %31 = vector.broadcast %cst_17 : f32 to vector<8x1xf32>
    %32 = arith.mulf %30, %31 : vector<8x1xf32>
    %cst_18 = arith.constant 9.99999974E-6 : f32
    %33 = vector.broadcast %cst_18 : f32 to vector<8x1xf32>
    %34 = arith.addf %32, %33 : vector<8x1xf32>
    %35 = math.rsqrt %34 : vector<8x1xf32>
    %36 = vector.broadcast %35 : vector<8x1xf32> to vector<8x128xf32>
    %37 = arith.mulf %25, %36 : vector<8x128xf32>
    %38 = vector.broadcast %15 : vector<1x128xf32> to vector<8x128xf32>
    %39 = arith.mulf %37, %38 : vector<8x128xf32>
    %40 = vector.broadcast %17 : vector<1x128xf32> to vector<8x128xf32>
    %41 = arith.addf %39, %40 : vector<8x128xf32>
    %cst_19 = arith.constant 0.000000e+00 : f32
    %42 = vector.broadcast %cst_19 : f32 to vector<8x128xf32>
    %43 = arith.maximumf %41, %42 : vector<8x128xf32>
    %c0_20 = arith.constant 0 : index
    %c0_21 = arith.constant 0 : index
    %c0_22 = arith.constant 0 : index
    %44 = vector.load %arg7[%c0_20, %c0_21, %c0_22] : memref<1x128x128xf32, #tpu.memory_space<vmem>>, vector<1x128x128xf32>
    %45 = vector.shape_cast %44 : vector<1x128x128xf32> to vector<128x128xf32>
    %cst_23 = arith.constant dense<0.000000e+00> : vector<8x128xf32>
    %46 = tpu.matmul %43, %45, %cst_23 {dimension_numbers = #tpu.dot_dimension_numbers<[1], [0], [0], [1], [0, 0, 1, 1], [], []>} : vector<8x128xf32>, vector<128x128xf32>, vector<8x128xf32> -> vector<8x128xf32>
    %c0_24 = arith.constant 0 : index
    %c0_25 = arith.constant 0 : index
    %c0_26 = arith.constant 0 : index
    %47 = vector.load %arg8[%c0_24, %c0_25, %c0_26] : memref<1x1x128xf32, #tpu.memory_space<vmem>>, vector<1x1x128xf32>
    %48 = vector.shape_cast %47 : vector<1x1x128xf32> to vector<1x128xf32>
    %49 = vector.broadcast %48 : vector<1x128xf32> to vector<8x128xf32>
    %50 = arith.addf %46, %49 : vector<8x128xf32>
    %c0_27 = arith.constant 0 : index
    %c0_28 = arith.constant 0 : index
    %c0_29 = arith.constant 0 : index
    %51 = vector.load %arg9[%c0_27, %c0_28, %c0_29] : memref<1x1x128xf32, #tpu.memory_space<vmem>>, vector<1x1x128xf32>
    %52 = vector.shape_cast %51 : vector<1x1x128xf32> to vector<1x128xf32>
    %c0_30 = arith.constant 0 : index
    %c0_31 = arith.constant 0 : index
    %c0_32 = arith.constant 0 : index
    %53 = vector.load %arg10[%c0_30, %c0_31, %c0_32] : memref<1x1x128xf32, #tpu.memory_space<vmem>>, vector<1x1x128xf32>
    %54 = vector.shape_cast %53 : vector<1x1x128xf32> to vector<1x128xf32>
    %55 = vector.broadcast %6 : vector<1x128xf32> to vector<8x128xf32>
    %56 = arith.mulf %50, %55 : vector<8x128xf32>
    %cst_33 = arith.constant dense<0.000000e+00> : vector<8xf32>
    %57 = vector.multi_reduction <add>, %56, %cst_33 [1] : vector<8x128xf32> to vector<8xf32>
    %58 = vector.shape_cast %57 : vector<8xf32> to vector<8x1xf32>
    %cst_34 = arith.constant 3.125000e-02 : f32
    %59 = vector.broadcast %cst_34 : f32 to vector<8x1xf32>
    %60 = arith.mulf %58, %59 : vector<8x1xf32>
    %61 = vector.broadcast %60 : vector<8x1xf32> to vector<8x128xf32>
    %62 = arith.subf %50, %61 : vector<8x128xf32>
    %63 = vector.broadcast %6 : vector<1x128xf32> to vector<8x128xf32>
    %64 = arith.mulf %62, %63 : vector<8x128xf32>
    %65 = arith.mulf %64, %64 : vector<8x128xf32>
    %cst_35 = arith.constant dense<0.000000e+00> : vector<8xf32>
    %66 = vector.multi_reduction <add>, %65, %cst_35 [1] : vector<8x128xf32> to vector<8xf32>
    %67 = vector.shape_cast %66 : vector<8xf32> to vector<8x1xf32>
    %cst_36 = arith.constant 3.125000e-02 : f32
    %68 = vector.broadcast %cst_36 : f32 to vector<8x1xf32>
    %69 = arith.mulf %67, %68 : vector<8x1xf32>
    %cst_37 = arith.constant 9.99999974E-6 : f32
    %70 = vector.broadcast %cst_37 : f32 to vector<8x1xf32>
    %71 = arith.addf %69, %70 : vector<8x1xf32>
    %72 = math.rsqrt %71 : vector<8x1xf32>
    %73 = vector.broadcast %72 : vector<8x1xf32> to vector<8x128xf32>
    %74 = arith.mulf %62, %73 : vector<8x128xf32>
    %75 = vector.broadcast %52 : vector<1x128xf32> to vector<8x128xf32>
    %76 = arith.mulf %74, %75 : vector<8x128xf32>
    %77 = vector.broadcast %54 : vector<1x128xf32> to vector<8x128xf32>
    %78 = arith.addf %76, %77 : vector<8x128xf32>
    %cst_38 = arith.constant 0.000000e+00 : f32
    %79 = vector.broadcast %cst_38 : f32 to vector<8x128xf32>
    %80 = arith.maximumf %78, %79 : vector<8x128xf32>
    %c0_39 = arith.constant 0 : index
    %c0_40 = arith.constant 0 : index
    %c0_41 = arith.constant 0 : index
    %81 = vector.load %arg11[%c0_39, %c0_40, %c0_41] : memref<1x128x128xf32, #tpu.memory_space<vmem>>, vector<1x128x128xf32>
    %82 = vector.shape_cast %81 : vector<1x128x128xf32> to vector<128x128xf32>
    %cst_42 = arith.constant dense<0.000000e+00> : vector<8x128xf32>
    %83 = tpu.matmul %80, %82, %cst_42 {dimension_numbers = #tpu.dot_dimension_numbers<[1], [0], [0], [1], [0, 0, 1, 1], [], []>} : vector<8x128xf32>, vector<128x128xf32>, vector<8x128xf32> -> vector<8x128xf32>
    %c0_43 = arith.constant 0 : index
    %c0_44 = arith.constant 0 : index
    %c0_45 = arith.constant 0 : index
    %84 = vector.load %arg12[%c0_43, %c0_44, %c0_45] : memref<1x1x128xf32, #tpu.memory_space<vmem>>, vector<1x1x128xf32>
    %85 = vector.shape_cast %84 : vector<1x1x128xf32> to vector<1x128xf32>
    %86 = vector.broadcast %85 : vector<1x128xf32> to vector<8x128xf32>
    %87 = arith.addf %83, %86 : vector<8x128xf32>
    %88 = math.tanh %87 : vector<8x128xf32>
    %c0_46 = arith.constant 0 : index
    %c0_47 = arith.constant 0 : index
    %c0_48 = arith.constant 0 : index
    %89 = vector.load %arg13[%c0_46, %c0_47, %c0_48] : memref<1x8x128xf32, #tpu.memory_space<vmem>>, vector<1x8x128xf32>
    %90 = vector.shape_cast %89 : vector<1x8x128xf32> to vector<8x128xf32>
    %91 = vector.shape_cast %88 : vector<8x128xf32> to vector<1x8x128xf32>
    tpu.vector_store %arg13[%c0_46, %c0_47, %c0_48], %91 {strides = array<i32>} : memref<1x8x128xf32, #tpu.memory_space<vmem>>, vector<1x8x128xf32>,
    return
  }
  func.func @transform_0(%arg0: i32, %arg1: i32) -> (i32, i32, i32) {
    %c0_i32 = arith.constant 0 : i32
    %c0_i32_0 = arith.constant 0 : i32
    return %arg0, %arg1, %c0_i32 : i32, i32, i32
  }
  func.func @transform_1(%arg0: i32, %arg1: i32) -> (i32, i32, i32) {
    %c0_i32 = arith.constant 0 : i32
    %c0_i32_0 = arith.constant 0 : i32
    %c0_i32_1 = arith.constant 0 : i32
    return %arg0, %c0_i32, %c0_i32_0 : i32, i32, i32
  }
  func.func @transform_2(%arg0: i32, %arg1: i32) -> (i32, i32, i32) {
    %c0_i32 = arith.constant 0 : i32
    %c0_i32_0 = arith.constant 0 : i32
    %c0_i32_1 = arith.constant 0 : i32
    return %arg0, %c0_i32, %c0_i32_0 : i32, i32, i32
  }
  func.func @transform_3(%arg0: i32, %arg1: i32) -> (i32, i32, i32) {
    %c0_i32 = arith.constant 0 : i32
    %c0_i32_0 = arith.constant 0 : i32
    %c0_i32_1 = arith.constant 0 : i32
    return %arg0, %c0_i32, %c0_i32_0 : i32, i32, i32
  }
  func.func @transform_4(%arg0: i32, %arg1: i32) -> (i32, i32, i32) {
    %c0_i32 = arith.constant 0 : i32
    %c0_i32_0 = arith.constant 0 : i32
    %c0_i32_1 = arith.constant 0 : i32
    return %arg0, %c0_i32, %c0_i32_0 : i32, i32, i32
  }
  func.func @transform_5(%arg0: i32, %arg1: i32) -> (i32, i32, i32) {
    %c0_i32 = arith.constant 0 : i32
    %c0_i32_0 = arith.constant 0 : i32
    %c0_i32_1 = arith.constant 0 : i32
    return %arg0, %c0_i32, %c0_i32_0 : i32, i32, i32
  }
  func.func @transform_6(%arg0: i32, %arg1: i32) -> (i32, i32, i32) {
    %c0_i32 = arith.constant 0 : i32
    %c0_i32_0 = arith.constant 0 : i32
    %c0_i32_1 = arith.constant 0 : i32
    return %arg0, %c0_i32, %c0_i32_0 : i32, i32, i32
  }
  func.func @transform_7(%arg0: i32, %arg1: i32) -> (i32, i32, i32) {
    %c0_i32 = arith.constant 0 : i32
    %c0_i32_0 = arith.constant 0 : i32
    %c0_i32_1 = arith.constant 0 : i32
    return %arg0, %c0_i32, %c0_i32_0 : i32, i32, i32
  }
  func.func @transform_8(%arg0: i32, %arg1: i32) -> (i32, i32, i32) {
    %c0_i32 = arith.constant 0 : i32
    %c0_i32_0 = arith.constant 0 : i32
    %c0_i32_1 = arith.constant 0 : i32
    return %arg0, %c0_i32, %c0_i32_0 : i32, i32, i32
  }
  func.func @transform_9(%arg0: i32, %arg1: i32) -> (i32, i32, i32) {
    %c0_i32 = arith.constant 0 : i32
    %c0_i32_0 = arith.constant 0 : i32
    %c0_i32_1 = arith.constant 0 : i32
    return %arg0, %c0_i32, %c0_i32_0 : i32, i32, i32
  }
  func.func @transform_10(%arg0: i32, %arg1: i32) -> (i32, i32, i32) {
    %c0_i32 = arith.constant 0 : i32
    %c0_i32_0 = arith.constant 0 : i32
    %c0_i32_1 = arith.constant 0 : i32
    return %arg0, %c0_i32, %c0_i32_0 : i32, i32, i32
  }
  func.func @transform_11(%arg0: i32, %arg1: i32) -> (i32, i32, i32) {
    %c0_i32 = arith.constant 0 : i32
    %c0_i32_0 = arith.constant 0 : i32
    return %arg0, %arg1, %c0_i32 : i32, i32, i32
  }
}

</mosaic_0001>

<llo_original>
// kernel: editor_forward.1
$region0: #{editor_forward.1}
  #allocation0 [shape = 'u32[]', space=smem, size = 0x4, offset = 0x4, fixed_abs, tag = 'smem constant byte address 0x4 - core index']
  #allocation1 [shape = 'u32[144,128]{1,0:T(1,128)}', space=vmem, size = 0x12000, scoped, tag = 'internal scratch']
  %s0 = inlined_call_operand.vmem [shape: f32[2,8,128], index: 0, kind: input, shape index: {}]
  %s1 = inlined_call_operand.vmem [shape: f32[2,128,128], index: 1, kind: input, shape index: {}]
  %s2 = inlined_call_operand.vmem [shape: f32[2,1,128], index: 2, kind: input, shape index: {}]
  %s3 = inlined_call_operand.vmem [shape: f32[2,1,128], index: 3, kind: input, shape index: {}]
  %s4 = inlined_call_operand.vmem [shape: f32[2,1,128], index: 4, kind: input, shape index: {}]
  %s5 = inlined_call_operand.vmem [shape: f32[2,128,128], index: 5, kind: input, shape index: {}]
  %s6 = inlined_call_operand.vmem [shape: f32[2,1,128], index: 6, kind: input, shape index: {}]
  %s7 = inlined_call_operand.vmem [shape: f32[2,1,128], index: 7, kind: input, shape index: {}]
  %s8 = inlined_call_operand.vmem [shape: f32[2,1,128], index: 8, kind: input, shape index: {}]
  %s9 = inlined_call_operand.vmem [shape: f32[2,128,128], index: 9, kind: input, shape index: {}]
  %s10 = inlined_call_operand.vmem [shape: f32[2,1,128], index: 10, kind: input, shape index: {}]
  %s11 = inlined_call_operand.vmem [shape: f32[2,8,128], index: 11, kind: output, shape index: {}]
  %s12 = sld [smem:[#allocation0]]
  $region77: #{editor_forward.1} parent=0
    _
  %s14 = ssub.s32 1, %s12
  %s15 = scalar_select 0, %s14, %s12
  loop: start=0, step=1, limit=4
  $region2: #{editor_forward.1} parent=0 // loop_pre_header
    _
  $region3: #{editor_forward.1} parent=0 // loop_header
    %s17 = sphi 0, %s21
    %p18 = scmp.ge.s32.totalorder %s17, 4
    %s24 = sphi 0, %s36
    %s25 = sphi 0, %s32
    %s26 = sphi 0, %s24
    %s27 = sphi 0, %s25
    %s28 = sphi 0, %s26
    %s29 = sphi 0, %s27
    %s41 = sphi 0, %s43
    %s44 = sphi 0, %s41
    %s45 = sphi 0, %s44
    %s61 = sphi 0, %s45
    %s67 = sphi 0, %s69
    %s70 = sphi 0, %s67
    %s71 = sphi 0, %s70
    %s87 = sphi 0, %s71
    %s93 = sphi 0, %s95
    %s96 = sphi 0, %s93
    %s97 = sphi 0, %s96
    %s113 = sphi 0, %s97
    %s119 = sphi 0, %s121
    %s122 = sphi 0, %s119
    %s123 = sphi 0, %s122
    %s139 = sphi 0, %s123
    %s145 = sphi 0, %s147
    %s148 = sphi 0, %s145
    %s149 = sphi 0, %s148
    %s165 = sphi 0, %s149
    %s171 = sphi 0, %s173
    %s174 = sphi 0, %s171
    %s175 = sphi 0, %s174
    %s191 = sphi 0, %s175
    %s197 = sphi 0, %s199
    %s200 = sphi 0, %s197
    %s201 = sphi 0, %s200
    %s217 = sphi 0, %s201
    %s223 = sphi 0, %s225
    %s226 = sphi 0, %s223
    %s227 = sphi 0, %s226
    %s243 = sphi 0, %s227
    %s249 = sphi 0, %s251
    %s252 = sphi 0, %s249
    %s253 = sphi 0, %s252
    %s269 = sphi 0, %s253
    %s275 = sphi 0, %s277
    %s278 = sphi 0, %s275
    %s279 = sphi 0, %s278
    %s295 = sphi 0, %s279
    %s301 = sphi 0, %s303
    %s304 = sphi 0, %s301
    %s305 = sphi 0, %s304
    %s321 = sphi 0, %s305
    %s329 = sphi 0, %s331
    %s332 = sphi 0, %s329
    %s333 = sphi 0, %s332
    %s349 = sphi 0, %s333
  $region4: #{editor_forward.1} parent=0 // loop_header_branch
    %20 = sbr.rel (%p18) target = $region8
  $region5: #{editor_forward.1} parent=0 // loop_body
    %s22 = ssub.s32 %s17, 1
    %s23 = ssub.s32 %s17, 2
    %s30 = sadd.s32 1, %s25
    %p31 = scmp.ge.s32.totalorder %s30, 1
    %s32 = scalar_select %p31, 0, %s30
    %s33 = sadd.s32 1, %s24
    %s34 = scalar_select %p31, %s33, %s24
    %p35 = scmp.ge.s32.totalorder %s34, 2
    %s36 = scalar_select %p35, 0, %s34
    %s37 = ssub.s32 %s24, %s36
    %s38 = ssub.s32 %s25, %s32
    %s39 = sor.u32 %s37, %s38
    %p40 = scmp.eq.s32.totalorder %s39, 0
    %s42 = sadd.s32 %s41, 1
    %s43 = scalar_select %p40, %s41, %s42
    %p46 = pneg %p40
    %p47 = scmp.eq.s32.totalorder %s17, 1
    %p48 = por %p46, %p47
    %p49 = scmp.ne.s32.totalorder %s41, %s44
    %p50 = scmp.eq.s32.totalorder %s17, 0
    %p51 = por %p49, %p50
    %p52 = scmp.ne.s32.totalorder %s41, %s44
    %p53 = scmp.eq.s32.totalorder %s22, 1
    %p54 = por %p52, %p53
    %p55 = scmp.ne.s32.totalorder %s44, %s45
    %p56 = scmp.eq.s32.totalorder %s22, 0
    %p57 = por %p55, %p56
    %p58 = scmp.ne.s32.totalorder %s44, %s45
    %p59 = scmp.eq.s32.totalorder %s23, 1
    %p60 = por %p58, %p59
    %p62 = scmp.ne.s32.totalorder %s45, %s61
    %p63 = scmp.eq.s32.totalorder %s23, 0
    %p64 = por %p62, %p63
    %s65 = ssub.s32 %s24, %s36
    %p66 = scmp.eq.s32.totalorder %s65, 0
    %s68 = sadd.s32 %s67, 1
    %s69 = scalar_select %p66, %s67, %s68
    %p72 = pneg %p66
    %p73 = scmp.eq.s32.totalorder %s17, 1
    %p74 = por %p72, %p73
    %p75 = scmp.ne.s32.totalorder %s67, %s70
    %p76 = scmp.eq.s32.totalorder %s17, 0
    %p77 = por %p75, %p76
    %p78 = scmp.ne.s32.totalorder %s67, %s70
    %p79 = scmp.eq.s32.totalorder %s22, 1
    %p80 = por %p78, %p79
    %p81 = scmp.ne.s32.totalorder %s70, %s71
    %p82 = scmp.eq.s32.totalorder %s22, 0
    %p83 = por %p81, %p82
    %p84 = scmp.ne.s32.totalorder %s70, %s71
    %p85 = scmp.eq.s32.totalorder %s23, 1
    %p86 = por %p84, %p85
    %p88 = scmp.ne.s32.totalorder %s71, %s87
    %p89 = scmp.eq.s32.totalorder %s23, 0
    %p90 = por %p88, %p89
    %s91 = ssub.s32 %s24, %s36
    %p92 = scmp.eq.s32.totalorder %s91, 0
    %s94 = sadd.s32 %s93, 1
    %s95 = scalar_select %p92, %s93, %s94
    %p98 = pneg %p92
    %p99 = scmp.eq.s32.totalorder %s17, 1
    %p100 = por %p98, %p99
    %p101 = scmp.ne.s32.totalorder %s93, %s96
    %p102 = scmp.eq.s32.totalorder %s17, 0
    %p103 = por %p101, %p102
    %p104 = scmp.ne.s32.totalorder %s93, %s96
    %p105 = scmp.eq.s32.totalorder %s22, 1
    %p106 = por %p104, %p105
    %p107 = scmp.ne.s32.totalorder %s96, %s97
    %p108 = scmp.eq.s32.totalorder %s22, 0
    %p109 = por %p107, %p108
    %p110 = scmp.ne.s32.totalorder %s96, %s97
    %p111 = scmp.eq.s32.totalorder %s23, 1
    %p112 = por %p110, %p111
    %p114 = scmp.ne.s32.totalorder %s97, %s113
    %p115 = scmp.eq.s32.totalorder %s23, 0
    %p116 = por %p114, %p115
    %s117 = ssub.s32 %s24, %s36
    %p118 = scmp.eq.s32.totalorder %s117, 0
    %s120 = sadd.s32 %s119, 1
    %s121 = scalar_select %p118, %s119, %s120
    %p124 = pneg %p118
    %p125 = scmp.eq.s32.totalorder %s17, 1
    %p126 = por %p124, %p125
    %p127 = scmp.ne.s32.totalorder %s119, %s122
    %p128 = scmp.eq.s32.totalorder %s17, 0
    %p129 = por %p127, %p128
    %p130 = scmp.ne.s32.totalorder %s119, %s122
    %p131 = scmp.eq.s32.totalorder %s22, 1
    %p132 = por %p130, %p131
    %p133 = scmp.ne.s32.totalorder %s122, %s123
    %p134 = scmp.eq.s32.totalorder %s22, 0
    %p135 = por %p133, %p134
    %p136 = scmp.ne.s32.totalorder %s122, %s123
    %p137 = scmp.eq.s32.totalorder %s23, 1
    %p138 = por %p136, %p137
    %p140 = scmp.ne.s32.totalorder %s123, %s139
    %p141 = scmp.eq.s32.totalorder %s23, 0
    %p142 = por %p140, %p141
    %s143 = ssub.s32 %s24, %s36
    %p144 = scmp.eq.s32.totalorder %s143, 0
    %s146 = sadd.s32 %s145, 1
    %s147 = scalar_select %p144, %s145, %s146
    %p150 = pneg %p144
    %p151 = scmp.eq.s32.totalorder %s17, 1
    %p152 = por %p150, %p151
    %p153 = scmp.ne.s32.totalorder %s145, %s148
    %p154 = scmp.eq.s32.totalorder %s17, 0
    %p155 = por %p153, %p154
    %p156 = scmp.ne.s32.totalorder %s145, %s148
    %p157 = scmp.eq.s32.totalorder %s22, 1
    %p158 = por %p156, %p157
    %p159 = scmp.ne.s32.totalorder %s148, %s149
    %p160 = scmp.eq.s32.totalorder %s22, 0
    %p161 = por %p159, %p160
    %p162 = scmp.ne.s32.totalorder %s148, %s149
    %p163 = scmp.eq.s32.totalorder %s23, 1
    %p164 = por %p162, %p163
    %p166 = scmp.ne.s32.totalorder %s149, %s165
    %p167 = scmp.eq.s32.totalorder %s23, 0
    %p168 = por %p166, %p167
    %s169 = ssub.s32 %s24, %s36
    %p170 = scmp.eq.s32.totalorder %s169, 0
    %s172 = sadd.s32 %s171, 1
    %s173 = scalar_select %p170, %s171, %s172
    %p176 = pneg %p170
    %p177 = scmp.eq.s32.totalorder %s17, 1
    %p178 = por %p176, %p177
    %p179 = scmp.ne.s32.totalorder %s171, %s174
    %p180 = scmp.eq.s32.totalorder %s17, 0
    %p181 = por %p179, %p180
    %p182 = scmp.ne.s32.totalorder %s171, %s174
    %p183 = scmp.eq.s32.totalorder %s22, 1
    %p184 = por %p182, %p183
    %p185 = scmp.ne.s32.totalorder %s174, %s175
    %p186 = scmp.eq.s32.totalorder %s22, 0
    %p187 = por %p185, %p186
    %p188 = scmp.ne.s32.totalorder %s174, %s175
    %p189 = scmp.eq.s32.totalorder %s23, 1
    %p190 = por %p188, %p189
    %p192 = scmp.ne.s32.totalorder %s175, %s191
    %p193 = scmp.eq.s32.totalorder %s23, 0
    %p194 = por %p192, %p193
    %s195 = ssub.s32 %s24, %s36
    %p196 = scmp.eq.s32.totalorder %s195, 0
    %s198 = sadd.s32 %s197, 1
    %s199 = scalar_select %p196, %s197, %s198
    %p202 = pneg %p196
    %p203 = scmp.eq.s32.totalorder %s17, 1
    %p204 = por %p202, %p203
    %p205 = scmp.ne.s32.totalorder %s197, %s200
    %p206 = scmp.eq.s32.totalorder %s17, 0
    %p207 = por %p205, %p206
    %p208 = scmp.ne.s32.totalorder %s197, %s200
    %p209 = scmp.eq.s32.totalorder %s22, 1
    %p210 = por %p208, %p209
    %p211 = scmp.ne.s32.totalorder %s200, %s201
    %p212 = scmp.eq.s32.totalorder %s22, 0
    %p213 = por %p211, %p212
    %p214 = scmp.ne.s32.totalorder %s200, %s201
    %p215 = scmp.eq.s32.totalorder %s23, 1
    %p216 = por %p214, %p215
    %p218 = scmp.ne.s32.totalorder %s201, %s217
    %p219 = scmp.eq.s32.totalorder %s23, 0
    %p220 = por %p218, %p219
    %s221 = ssub.s32 %s24, %s36
    %p222 = scmp.eq.s32.totalorder %s221, 0
    %s224 = sadd.s32 %s223, 1
    %s225 = scalar_select %p222, %s223, %s224
    %p228 = pneg %p222
    %p229 = scmp.eq.s32.totalorder %s17, 1
    %p230 = por %p228, %p229
    %p231 = scmp.ne.s32.totalorder %s223, %s226
    %p232 = scmp.eq.s32.totalorder %s17, 0
    %p233 = por %p231, %p232
    %p234 = scmp.ne.s32.totalorder %s223, %s226
    %p235 = scmp.eq.s32.totalorder %s22, 1
    %p236 = por %p234, %p235
    %p237 = scmp.ne.s32.totalorder %s226, %s227
    %p238 = scmp.eq.s32.totalorder %s22, 0
    %p239 = por %p237, %p238
    %p240 = scmp.ne.s32.totalorder %s226, %s227
    %p241 = scmp.eq.s32.totalorder %s23, 1
    %p242 = por %p240, %p241
    %p244 = scmp.ne.s32.totalorder %s227, %s243
    %p245 = scmp.eq.s32.totalorder %s23, 0
    %p246 = por %p244, %p245
    %s247 = ssub.s32 %s24, %s36
    %p248 = scmp.eq.s32.totalorder %s247, 0
    %s250 = sadd.s32 %s249, 1
    %s251 = scalar_select %p248, %s249, %s250
    %p254 = pneg %p248
    %p255 = scmp.eq.s32.totalorder %s17, 1
    %p256 = por %p254, %p255
    %p257 = scmp.ne.s32.totalorder %s249, %s252
    %p258 = scmp.eq.s32.totalorder %s17, 0
    %p259 = por %p257, %p258
    %p260 = scmp.ne.s32.totalorder %s249, %s252
    %p261 = scmp.eq.s32.totalorder %s22, 1
    %p262 = por %p260, %p261
    %p263 = scmp.ne.s32.totalorder %s252, %s253
    %p264 = scmp.eq.s32.totalorder %s22, 0
    %p265 = por %p263, %p264
    %p266 = scmp.ne.s32.totalorder %s252, %s253
    %p267 = scmp.eq.s32.totalorder %s23, 1
    %p268 = por %p266, %p267
    %p270 = scmp.ne.s32.totalorder %s253, %s269
    %p271 = scmp.eq.s32.totalorder %s23, 0
    %p272 = por %p270, %p271
    %s273 = ssub.s32 %s24, %s36
    %p274 = scmp.eq.s32.totalorder %s273, 0
    %s276 = sadd.s32 %s275, 1
    %s277 = scalar_select %p274, %s275, %s276
    %p280 = pneg %p274
    %p281 = scmp.eq.s32.totalorder %s17, 1
    %p282 = por %p280, %p281
    %p283 = scmp.ne.s32.totalorder %s275, %s278
    %p284 = scmp.eq.s32.totalorder %s17, 0
    %p285 = por %p283, %p284
    %p286 = scmp.ne.s32.totalorder %s275, %s278
    %p287 = scmp.eq.s32.totalorder %s22, 1
    %p288 = por %p286, %p287
    %p289 = scmp.ne.s32.totalorder %s278, %s279
    %p290 = scmp.eq.s32.totalorder %s22, 0
    %p291 = por %p289, %p290
    %p292 = scmp.ne.s32.totalorder %s278, %s279
    %p293 = scmp.eq.s32.totalorder %s23, 1
    %p294 = por %p292, %p293
    %p296 = scmp.ne.s32.totalorder %s279, %s295
    %p297 = scmp.eq.s32.totalorder %s23, 0
    %p298 = por %p296, %p297
    %s299 = ssub.s32 %s24, %s36
    %p300 = scmp.eq.s32.totalorder %s299, 0
    %s302 = sadd.s32 %s301, 1
    %s303 = scalar_select %p300, %s301, %s302
    %p306 = pneg %p300
    %p307 = scmp.eq.s32.totalorder %s17, 1
    %p308 = por %p306, %p307
    %p309 = scmp.ne.s32.totalorder %s301, %s304
    %p310 = scmp.eq.s32.totalorder %s17, 0
    %p311 = por %p309, %p310
    %p312 = scmp.ne.s32.totalorder %s301, %s304
    %p313 = scmp.eq.s32.totalorder %s22, 1
    %p314 = por %p312, %p313
    %p315 = scmp.ne.s32.totalorder %s304, %s305
    %p316 = scmp.eq.s32.totalorder %s22, 0
    %p317 = por %p315, %p316
    %p318 = scmp.ne.s32.totalorder %s304, %s305
    %p319 = scmp.eq.s32.totalorder %s23, 1
    %p320 = por %p318, %p319
    %p322 = scmp.ne.s32.totalorder %s305, %s321
    %p323 = scmp.eq.s32.totalorder %s23, 0
    %p324 = por %p322, %p323
    %s325 = ssub.s32 %s24, %s36
    %s326 = ssub.s32 %s25, %s32
    %s327 = sor.u32 %s325, %s326
    %p328 = scmp.eq.s32.totalorder %s327, 0
    %s330 = sadd.s32 %s329, 1
    %s331 = scalar_select %p328, %s329, %s330
    %p334 = pneg %p328
    %p335 = scmp.eq.s32.totalorder %s17, 1
    %p336 = por %p334, %p335
    %p337 = scmp.ne.s32.totalorder %s329, %s332
    %p338 = scmp.eq.s32.totalorder %s17, 0
    %p339 = por %p337, %p338
    %p340 = scmp.ne.s32.totalorder %s329, %s332
    %p341 = scmp.eq.s32.totalorder %s22, 1
    %p342 = por %p340, %p341
    %p343 = scmp.ne.s32.totalorder %s332, %s333
    %p344 = scmp.eq.s32.totalorder %s22, 0
    %p345 = por %p343, %p344
    %p346 = scmp.ne.s32.totalorder %s332, %s333
    %p347 = scmp.eq.s32.totalorder %s23, 1
    %p348 = por %p346, %p347
    %p350 = scmp.ne.s32.totalorder %s333, %s349
    %p351 = scmp.eq.s32.totalorder %s23, 0
    %p352 = por %p350, %p351
    %p353 = scmp.le.s32.totalorder 1, %s17
    %p354 = scmp.lt.s32.totalorder %s17, 3
    %p355 = pnand %p353, %p354
    %p356 = pneg %p355
    // Predicated region
    $region9: #{editor_forward.1} parent=5 // pred_check
      _
    $region10: #{editor_forward.1} parent=5 // pred_check_branch
      %358 = sbr.rel (%p355) target = $region12
    $region11: #{editor_forward.1} parent=5 // pred_region
      %s359 = ssub.s32 %s17, 1
    $region12: #{editor_forward.1} parent=5 // pred_fallthru
      _
    %p360 = scmp.lt.s32.totalorder %s17, 2
    // Predicated region
    $region13: #{editor_forward.1} parent=5 // pred_check
      %p361 = pneg %p360
    $region14: #{editor_forward.1} parent=5 // pred_check_branch
      %363 = sbr.rel (%p361) target = $region16
    $region15: #{editor_forward.1} parent=5 // pred_region
      // Predicated region
      $region17: #{editor_forward.1} parent=15 // pred_check
        %p364 = pneg %p51
      $region18: #{editor_forward.1} parent=15 // pred_check_branch
        %366 = sbr.rel (%p364) target = $region20
      $region19: #{editor_forward.1} parent=15 // pred_region
        %p367 = scmp.lt.s32.totalorder %s24, 1
        %s368 = scalar_select %p367, %s24, 1
        %p369 = scmp.lt.s32.totalorder %s25, 0
        %s370 = scalar_select %p369, %s25, 0
        %s371 = sadd.s32 %s370, %s368
        %s372 = smul.addr %s371, 8
        %s373 = scalar_lea.vmem %s0, %s372
      $region20: #{editor_forward.1} parent=15 // pred_fallthru
        _
      // Predicated region
      $region21: #{editor_forward.1} parent=15 // pred_check
        %p374 = pneg %p77
      $region22: #{editor_forward.1} parent=15 // pred_check_branch
        %376 = sbr.rel (%p374) target = $region24
      $region23: #{editor_forward.1} parent=15 // pred_region
        %p377 = scmp.lt.s32.totalorder %s24, 1
        %s378 = scalar_select %p377, %s24, 1
        %s379 = smul.addr %s378, 16
        %s380 = smul.addr %s379, 8
        %s381 = scalar_lea.vmem %s1, %s380
      $region24: #{editor_forward.1} parent=15 // pred_fallthru
        _
      // Predicated region
      $region25: #{editor_forward.1} parent=15 // pred_check
        %p382 = pneg %p103
      $region26: #{editor_forward.1} parent=15 // pred_check_branch
        %384 = sbr.rel (%p382) target = $region28
      $region27: #{editor_forward.1} parent=15 // pred_region
        %p385 = scmp.lt.s32.totalorder %s24, 1
        %s386 = scalar_select %p385, %s24, 1
        %s387 = scalar_lea.vmem %s2, %s386
      $region28: #{editor_forward.1} parent=15 // pred_fallthru
        _
      // Predicated region
      $region29: #{editor_forward.1} parent=15 // pred_check
        %p388 = pneg %p129
      $region30: #{editor_forward.1} parent=15 // pred_check_branch
        %390 = sbr.rel (%p388) target = $region32
      $region31: #{editor_forward.1} parent=15 // pred_region
        %p391 = scmp.lt.s32.totalorder %s24, 1
        %s392 = scalar_select %p391, %s24, 1
        %s393 = scalar_lea.vmem %s3, %s392
      $region32: #{editor_forward.1} parent=15 // pred_fallthru
        _
      // Predicated region
      $region33: #{editor_forward.1} parent=15 // pred_check
        %p394 = pneg %p155
      $region34: #{editor_forward.1} parent=15 // pred_check_branch
        %396 = sbr.rel (%p394) target = $region36
      $region35: #{editor_forward.1} parent=15 // pred_region
        %p397 = scmp.lt.s32.totalorder %s24, 1
        %s398 = scalar_select %p397, %s24, 1
        %s399 = scalar_lea.vmem %s4, %s398
      $region36: #{editor_forward.1} parent=15 // pred_fallthru
        _
      // Predicated region
      $region37: #{editor_forward.1} parent=15 // pred_check
        %p400 = pneg %p181
      $region38: #{editor_forward.1} parent=15 // pred_check_branch
        %402 = sbr.rel (%p400) target = $region40
      $region39: #{editor_forward.1} parent=15 // pred_region
        %p403 = scmp.lt.s32.totalorder %s24, 1
        %s404 = scalar_select %p403, %s24, 1
        %s405 = smul.addr %s404, 16
        %s406 = smul.addr %s405, 8
        %s407 = scalar_lea.vmem %s5, %s406
      $region40: #{editor_forward.1} parent=15 // pred_fallthru
        _
      // Predicated region
      $region41: #{editor_forward.1} parent=15 // pred_check
        %p408 = pneg %p207
      $region42: #{editor_forward.1} parent=15 // pred_check_branch
        %410 = sbr.rel (%p408) target = $region44
      $region43: #{editor_forward.1} parent=15 // pred_region
        %p411 = scmp.lt.s32.totalorder %s24, 1
        %s412 = scalar_select %p411, %s24, 1
        %s413 = scalar_lea.vmem %s6, %s412
      $region44: #{editor_forward.1} parent=15 // pred_fallthru
        _
      // Predicated region
      $region45: #{editor_forward.1} parent=15 // pred_check
        %p414 = pneg %p233
      $region46: #{editor_forward.1} parent=15 // pred_check_branch
        %416 = sbr.rel (%p414) target = $region48
      $region47: #{editor_forward.1} parent=15 // pred_region
        %p417 = scmp.lt.s32.totalorder %s24, 1
        %s418 = scalar_select %p417, %s24, 1
        %s419 = scalar_lea.vmem %s7, %s418
      $region48: #{editor_forward.1} parent=15 // pred_fallthru
        _
      // Predicated region
      $region49: #{editor_forward.1} parent=15 // pred_check
        %p420 = pneg %p259
      $region50: #{editor_forward.1} parent=15 // pred_check_branch
        %422 = sbr.rel (%p420) target = $region52
      $region51: #{editor_forward.1} parent=15 // pred_region
        %p423 = scmp.lt.s32.totalorder %s24, 1
        %s424 = scalar_select %p423, %s24, 1
        %s425 = scalar_lea.vmem %s8, %s424
      $region52: #{editor_forward.1} parent=15 // pred_fallthru
        _
      // Predicated region
      $region53: #{editor_forward.1} parent=15 // pred_check
        %p426 = pneg %p285
      $region54: #{editor_forward.1} parent=15 // pred_check_branch
        %428 = sbr.rel (%p426) target = $region56
      $region55: #{editor_forward.1} parent=15 // pred_region
        %p429 = scmp.lt.s32.totalorder %s24, 1
        %s430 = scalar_select %p429, %s24, 1
        %s431 = smul.addr %s430, 16
        %s432 = smul.addr %s431, 8
        %s433 = scalar_lea.vmem %s9, %s432
      $region56: #{editor_forward.1} parent=15 // pred_fallthru
        _
      // Predicated region
      $region57: #{editor_forward.1} parent=15 // pred_check
        %p434 = pneg %p311
      $region58: #{editor_forward.1} parent=15 // pred_check_branch
        %436 = sbr.rel (%p434) target = $region60
      $region59: #{editor_forward.1} parent=15 // pred_region
        %p437 = scmp.lt.s32.totalorder %s24, 1
        %s438 = scalar_select %p437, %s24, 1
        %s439 = scalar_lea.vmem %s10, %s438
      $region60: #{editor_forward.1} parent=15 // pred_fallthru
        _
    $region16: #{editor_forward.1} parent=5 // pred_fallthru
      _
    %p440 = scmp.le.s32.totalorder 1, %s17
    %p441 = scmp.lt.s32.totalorder %s17, 3
    %p442 = pnand %p440, %p441
    %p443 = pneg %p442
    // Predicated region
    $region61: #{editor_forward.1} parent=5 // pred_check
      _
    $region62: #{editor_forward.1} parent=5 // pred_check_branch
      %445 = sbr.rel (%p442) target = $region64
    $region63: #{editor_forward.1} parent=5 // pred_region
      %s446 = ssub.s32 %s17, 1
      %p447 = scmp.lt.s32.totalorder %s26, 1
      %s448 = scalar_select %p447, %s26, 1
      %p449 = scmp.lt.s32.totalorder %s27, 0
      %s450 = scalar_select %p449, %s27, 0
      %s451 = sadd.s32 %s450, %s448
      %s452 = smul.addr %s451, 8
      %s453 = scalar_lea.vmem %s0, %s452
      %p454 = pneg %p57
      %p455 = pneg %p54
      %p456 = scmp.lt.s32.totalorder %s26, 1
      %s457 = scalar_select %p456, %s26, 1
      %s458 = smul.addr %s457, 16
      %s459 = smul.addr %s458, 8
      %s460 = scalar_lea.vmem %s1, %s459
      %p461 = pneg %p83
      %p462 = pneg %p80
      %p463 = scmp.lt.s32.totalorder %s26, 1
      %s464 = scalar_select %p463, %s26, 1
      %s465 = scalar_lea.vmem %s2, %s464
      %p466 = pneg %p109
      %p467 = pneg %p106
      %p468 = scmp.lt.s32.totalorder %s26, 1
      %s469 = scalar_select %p468, %s26, 1
      %s470 = scalar_lea.vmem %s3, %s469
      %p471 = pneg %p135
      %p472 = pneg %p132
      %p473 = scmp.lt.s32.totalorder %s26, 1
      %s474 = scalar_select %p473, %s26, 1
      %s475 = scalar_lea.vmem %s4, %s474
      %p476 = pneg %p161
      %p477 = pneg %p158
      %p478 = scmp.lt.s32.totalorder %s26, 1
      %s479 = scalar_select %p478, %s26, 1
      %s480 = smul.addr %s479, 16
      %s481 = smul.addr %s480, 8
      %s482 = scalar_lea.vmem %s5, %s481
      %p483 = pneg %p187
      %p484 = pneg %p184
      %p485 = scmp.lt.s32.totalorder %s26, 1
      %s486 = scalar_select %p485, %s26, 1
      %s487 = scalar_lea.vmem %s6, %s486
      %p488 = pneg %p213
      %p489 = pneg %p210
      %p490 = scmp.lt.s32.totalorder %s26, 1
      %s491 = scalar_select %p490, %s26, 1
      %s492 = scalar_lea.vmem %s7, %s491
      %p493 = pneg %p239
      %p494 = pneg %p236
      %p495 = scmp.lt.s32.totalorder %s26, 1
      %s496 = scalar_select %p495, %s26, 1
      %s497 = scalar_lea.vmem %s8, %s496
      %p498 = pneg %p265
      %p499 = pneg %p262
      %p500 = scmp.lt.s32.totalorder %s26, 1
      %s501 = scalar_select %p500, %s26, 1
      %s502 = smul.addr %s501, 16
      %s503 = smul.addr %s502, 8
      %s504 = scalar_lea.vmem %s9, %s503
      %p505 = pneg %p291
      %p506 = pneg %p288
      %p507 = scmp.lt.s32.totalorder %s26, 1
      %s508 = scalar_select %p507, %s26, 1
      %s509 = scalar_lea.vmem %s10, %s508
      %p510 = pneg %p317
      %p511 = pneg %p314
      %p512 = pneg %p345
      %p513 = pneg %p342
      %p514 = scmp.lt.s32.totalorder %s26, 1
      %s515 = scalar_select %p514, %s26, 1
      %p516 = scmp.lt.s32.totalorder %s27, 0
      %s517 = scalar_select %p516, %s27, 0
      %s518 = sadd.s32 %s517, %s515
      %s519 = smul.addr %s518, 8
      %s520 = scalar_lea.vmem %s11, %s519
      %p521 = scmp.lt.s32.totalorder %s26, 1
      %s522 = scalar_select %p521, %s26, 1
      %p523 = scmp.lt.s32.totalorder %s27, 0
      %s524 = scalar_select %p523, %s27, 0
      %s525 = sadd.s32 %s524, %s522
      %s526 = smul.addr %s525, 8
      %s527 = scalar_lea.vmem %s0, %s526
      %p528 = scmp.lt.s32.totalorder %s26, 1
      %s529 = scalar_select %p528, %s26, 1
      %s530 = smul.addr %s529, 16
      %s531 = smul.addr %s530, 8
      %s532 = scalar_lea.vmem %s1, %s531
      %p533 = scmp.lt.s32.totalorder %s26, 1
      %s534 = scalar_select %p533, %s26, 1
      %s535 = scalar_lea.vmem %s2, %s534
      %p536 = scmp.lt.s32.totalorder %s26, 1
      %s537 = scalar_select %p536, %s26, 1
      %s538 = scalar_lea.vmem %s3, %s537
      %p539 = scmp.lt.s32.totalorder %s26, 1
      %s540 = scalar_select %p539, %s26, 1
      %s541 = scalar_lea.vmem %s4, %s540
      %p542 = scmp.lt.s32.totalorder %s26, 1
      %s543 = scalar_select %p542, %s26, 1
      %s544 = smul.addr %s543, 16
      %s545 = smul.addr %s544, 8
      %s546 = scalar_lea.vmem %s5, %s545
      %p547 = scmp.lt.s32.totalorder %s26, 1
      %s548 = scalar_select %p547, %s26, 1
      %s549 = scalar_lea.vmem %s6, %s548
      %p550 = scmp.lt.s32.totalorder %s26, 1
      %s551 = scalar_select %p550, %s26, 1
      %s552 = scalar_lea.vmem %s7, %s551
      %p553 = scmp.lt.s32.totalorder %s26, 1
      %s554 = scalar_select %p553, %s26, 1
      %s555 = scalar_lea.vmem %s8, %s554
      %p556 = scmp.lt.s32.totalorder %s26, 1
      %s557 = scalar_select %p556, %s26, 1
      %s558 = smul.addr %s557, 16
      %s559 = smul.addr %s558, 8
      %s560 = scalar_lea.vmem %s9, %s559
      %p561 = scmp.lt.s32.totalorder %s26, 1
      %s562 = scalar_select %p561, %s26, 1
      %s563 = scalar_lea.vmem %s10, %s562
      %p564 = scmp.lt.s32.totalorder %s26, 1
      %s565 = scalar_select %p564, %s26, 1
      %p566 = scmp.lt.s32.totalorder %s27, 0
      %s567 = scalar_select %p566, %s27, 0
      %s568 = sadd.s32 %s567, %s565
      %s569 = smul.addr %s568, 8
      %s570 = scalar_lea.vmem %s11, %s569
      %v571 = vld [vmem:[%s527] sm:$0xff]
      %v572 = vlaneseq
      %v573 = vand.u32 %v572, 127
      %vm574 = vcmp.lt.s32.totalorder %v573, 32
      %v575 = vsel %vm574, 1, 0
      %v576 = vcvt.s32.f32 %v575
      %v577 = vld [vmem:[%s532] sm:$0xff]
      %v578 = vld [vmem:[%s532 + $0x8] sm:$0xff]
      %v579 = vld [vmem:[%s532 + $0x10] sm:$0xff]
      %v580 = vld [vmem:[%s532 + $0x18] sm:$0xff]
      %v581 = vld [vmem:[%s532 + $0x20] sm:$0xff]
      %v582 = vld [vmem:[%s532 + $0x28] sm:$0xff]
      %v583 = vld [vmem:[%s532 + $0x30] sm:$0xff]
      %v584 = vld [vmem:[%s532 + $0x38] sm:$0xff]
      %v585 = vld [vmem:[%s532 + $0x40] sm:$0xff]
      %v586 = vld [vmem:[%s532 + $0x48] sm:$0xff]
      %v587 = vld [vmem:[%s532 + $0x50] sm:$0xff]
      %v588 = vld [vmem:[%s532 + $0x58] sm:$0xff]
      %v589 = vld [vmem:[%s532 + $0x60] sm:$0xff]
      %v590 = vld [vmem:[%s532 + $0x68] sm:$0xff]
      %v591 = vld [vmem:[%s532 + $0x70] sm:$0xff]
      %v592 = vld [vmem:[%s532 + $0x78] sm:$0xff]
      %v593 = vld [vmem:[%s535] sm:$0x1]
      %v595 = vlaneseq
      %v596 = vshrl.u32 %v595, 7
      %v597 = vsub.s32 0, %v596
      %v598 = vrot.slane %v593, %v597
      %600 = vmatprep.subr.mxu0 0.0
      %601 = vmatpush1.msra.mxu0 %v592
      %602 = vmatprep.subr.mxu0 0.0
      %603 = vmatpush1.msra.mxu0 %v591
      %604 = vmatprep.subr.mxu0 0.0
      %605 = vmatpush1.msra.mxu0 %v590
      %606 = vmatprep.subr.mxu0 0.0
      %607 = vmatpush1.msra.mxu0 %v589
      %608 = vmatprep.subr.mxu0 0.0
      %609 = vmatpush1.msra.mxu0 %v588
      %610 = vmatprep.subr.mxu0 0.0
      %611 = vmatpush1.msra.mxu0 %v587
      %612 = vmatprep.subr.mxu0 0.0
      %613 = vmatpush1.msra.mxu0 %v586
      %614 = vmatprep.subr.mxu0 0.0
      %615 = vmatpush1.msra.mxu0 %v585
      %616 = vmatprep.subr.mxu0 0.0
      %617 = vmatpush1.msra.mxu0 %v584
      %618 = vmatprep.subr.mxu0 0.0
      %619 = vmatpush1.msra.mxu0 %v583
      %620 = vmatprep.subr.mxu0 0.0
      %621 = vmatpush1.msra.mxu0 %v582
      %622 = vmatprep.subr.mxu0 0.0
      %623 = vmatpush1.msra.mxu0 %v581
      %624 = vmatprep.subr.mxu0 0.0
      %625 = vmatpush1.msra.mxu0 %v580
      %626 = vmatprep.subr.mxu0 0.0
      %627 = vmatpush1.msra.mxu0 %v579
      %628 = vmatprep.subr.mxu0 0.0
      %629 = vmatpush1.msra.mxu0 %v578
      %630 = vmatprep.subr.mxu0 0.0
      %631 = vmatpush1.msra.mxu0 %v577
      %632 = vmatprep.subr.mxu0 0.0
      %633 = vmatpush2.msra.mxu0 0.0
      %634 = vmatprep.subr.mxu0 0.0
      %635 = vmatpush2.msra.mxu0 0.0
      %636 = vmatprep.subr.mxu0 0.0
      %637 = vmatpush2.msra.mxu0 0.0
      %638 = vmatprep.subr.mxu0 0.0
      %639 = vmatpush2.msra.mxu0 0.0
      %640 = vmatprep.subr.mxu0 0.0
      %641 = vmatpush2.msra.mxu0 0.0
      %642 = vmatprep.subr.mxu0 0.0
      %643 = vmatpush2.msra.mxu0 0.0
      %644 = vmatprep.subr.mxu0 0.0
      %645 = vmatpush2.msra.mxu0 0.0
      %646 = vmatprep.subr.mxu0 0.0
      %647 = vmatpush2.msra.mxu0 0.0
      %648 = vmatprep.subr.mxu0 0.0
      %649 = vmatpush2.msra.mxu0 0.0
      %650 = vmatprep.subr.mxu0 0.0
      %651 = vmatpush2.msra.mxu0 0.0
      %652 = vmatprep.subr.mxu0 0.0
      %653 = vmatpush2.msra.mxu0 0.0
      %654 = vmatprep.subr.mxu0 0.0
      %655 = vmatpush2.msra.mxu0 0.0
      %656 = vmatprep.subr.mxu0 0.0
      %657 = vmatpush2.msra.mxu0 0.0
      %658 = vmatprep.subr.mxu0 0.0
      %659 = vmatpush2.msra.mxu0 0.0
      %660 = vmatprep.subr.mxu0 0.0
      %661 = vmatpush2.msra.mxu0 0.0
      %662 = vmatprep.subr.mxu0 0.0
      %663 = vmatpush2.msra.mxu0 0.0
      %664 = vmatprep.mubr.f32.mxu0 0.0
      %665 = vmatmul.mubr.f32.gmra.mxu0 %v571
      %v666 = vpop.f32.mrf.mxu0
      %v667 = vadd.f32 %v598, %v666
      %v668 = vpop.f32.mrf.mxu0
      %669 = vdwg.mxu0
      %v670 = vld [vmem:[%s538] sm:$0x1]
      %v671 = vld [vmem:[%s541] sm:$0x1]
      %v672 = vmul.f32 %v667, %v576
      %673 = vadd.xlane.f32.xlu0 %v672
      %v674 = vpop.xlane.xlu0 %673
      %v675 = vmul.f32 %v674, 0.03125
      %v676 = vsub.f32 %v667, %v675
      %v677 = vmul.f32 %v676, %v576
      %v678 = vmul.f32 %v677, %v677
      %679 = vadd.xlane.f32.xlu0 %v678
      %v680 = vpop.xlane.xlu0 %679
      %v681 = vmul.f32 %v680, 0.03125
      %v682 = vadd.f32 %v681, 1e-05
      %v683 = vrsqrt.pop %v682
      %v684 = vmul.f32 %v676, %v683
      %v686 = vlaneseq
      %v687 = vshrl.u32 %v686, 7
      %v688 = vsub.s32 0, %v687
      %v689 = vrot.slane %v670, %v688
      %v691 = vmul.f32 %v684, %v689
      %v693 = vlaneseq
      %v694 = vshrl.u32 %v693, 7
      %v695 = vsub.s32 0, %v694
      %v696 = vrot.slane %v671, %v695
      %v698 = vadd.f32 %v691, %v696
      %v699 = vmax.f32 %v698, 0.0
      %v700 = vld [vmem:[%s546] sm:$0xff]
      %v701 = vld [vmem:[%s546 + $0x8] sm:$0xff]
      %v702 = vld [vmem:[%s546 + $0x10] sm:$0xff]
      %v703 = vld [vmem:[%s546 + $0x18] sm:$0xff]
      %v704 = vld [vmem:[%s546 + $0x20] sm:$0xff]
      %v705 = vld [vmem:[%s546 + $0x28] sm:$0xff]
      %v706 = vld [vmem:[%s546 + $0x30] sm:$0xff]
      %v707 = vld [vmem:[%s546 + $0x38] sm:$0xff]
      %v708 = vld [vmem:[%s546 + $0x40] sm:$0xff]
      %v709 = vld [vmem:[%s546 + $0x48] sm:$0xff]
      %v710 = vld [vmem:[%s546 + $0x50] sm:$0xff]
      %v711 = vld [vmem:[%s546 + $0x58] sm:$0xff]
      %v712 = vld [vmem:[%s546 + $0x60] sm:$0xff]
      %v713 = vld [vmem:[%s546 + $0x68] sm:$0xff]
      %v714 = vld [vmem:[%s546 + $0x70] sm:$0xff]
      %v715 = vld [vmem:[%s546 + $0x78] sm:$0xff]
      %v716 = vld [vmem:[%s549] sm:$0x1]
      %v718 = vlaneseq
      %v719 = vshrl.u32 %v718, 7
      %v720 = vsub.s32 0, %v719
      %v721 = vrot.slane %v716, %v720
      %723 = vmatprep.subr.mxu0 0.0
      %724 = vmatpush1.msra.mxu0 %v715
      %725 = vmatprep.subr.mxu0 0.0
      %726 = vmatpush1.msra.mxu0 %v714
      %727 = vmatprep.subr.mxu0 0.0
      %728 = vmatpush1.msra.mxu0 %v713
      %729 = vmatprep.subr.mxu0 0.0
      %730 = vmatpush1.msra.mxu0 %v712
      %731 = vmatprep.subr.mxu0 0.0
      %732 = vmatpush1.msra.mxu0 %v711
      %733 = vmatprep.subr.mxu0 0.0
      %734 = vmatpush1.msra.mxu0 %v710
      %735 = vmatprep.subr.mxu0 0.0
      %736 = vmatpush1.msra.mxu0 %v709
      %737 = vmatprep.subr.mxu0 0.0
      %738 = vmatpush1.msra.mxu0 %v708
      %739 = vmatprep.subr.mxu0 0.0
      %740 = vmatpush1.msra.mxu0 %v707
      %741 = vmatprep.subr.mxu0 0.0
      %742 = vmatpush1.msra.mxu0 %v706
      %743 = vmatprep.subr.mxu0 0.0
      %744 = vmatpush1.msra.mxu0 %v705
      %745 = vmatprep.subr.mxu0 0.0
      %746 = vmatpush1.msra.mxu0 %v704
      %747 = vmatprep.subr.mxu0 0.0
      %748 = vmatpush1.msra.mxu0 %v703
      %749 = vmatprep.subr.mxu0 0.0
      %750 = vmatpush1.msra.mxu0 %v702
      %751 = vmatprep.subr.mxu0 0.0
      %752 = vmatpush1.msra.mxu0 %v701
      %753 = vmatprep.subr.mxu0 0.0
      %754 = vmatpush1.msra.mxu0 %v700
      %755 = vmatprep.subr.mxu0 0.0
      %756 = vmatpush2.msra.mxu0 0.0
      %757 = vmatprep.subr.mxu0 0.0
      %758 = vmatpush2.msra.mxu0 0.0
      %759 = vmatprep.subr.mxu0 0.0
      %760 = vmatpush2.msra.mxu0 0.0
      %761 = vmatprep.subr.mxu0 0.0
      %762 = vmatpush2.msra.mxu0 0.0
      %763 = vmatprep.subr.mxu0 0.0
      %764 = vmatpush2.msra.mxu0 0.0
      %765 = vmatprep.subr.mxu0 0.0
      %766 = vmatpush2.msra.mxu0 0.0
      %767 = vmatprep.subr.mxu0 0.0
      %768 = vmatpush2.msra.mxu0 0.0
      %769 = vmatprep.subr.mxu0 0.0
      %770 = vmatpush2.msra.mxu0 0.0
      %771 = vmatprep.subr.mxu0 0.0
      %772 = vmatpush2.msra.mxu0 0.0
      %773 = vmatprep.subr.mxu0 0.0
      %774 = vmatpush2.msra.mxu0 0.0
      %775 = vmatprep.subr.mxu0 0.0
      %776 = vmatpush2.msra.mxu0 0.0
      %777 = vmatprep.subr.mxu0 0.0
      %778 = vmatpush2.msra.mxu0 0.0
      %779 = vmatprep.subr.mxu0 0.0
      %780 = vmatpush2.msra.mxu0 0.0
      %781 = vmatprep.subr.mxu0 0.0
      %782 = vmatpush2.msra.mxu0 0.0
      %783 = vmatprep.subr.mxu0 0.0
      %784 = vmatpush2.msra.mxu0 0.0
      %785 = vmatprep.subr.mxu0 0.0
      %786 = vmatpush2.msra.mxu0 0.0
      %787 = vmatprep.mubr.f32.mxu0 0.0
      %788 = vmatmul.mubr.f32.gmra.mxu0 %v699
      %v789 = vpop.f32.mrf.mxu0
      %v790 = vadd.f32 %v721, %v789
      %v791 = vpop.f32.mrf.mxu0
      %792 = vdwg.mxu0
      %v793 = vld [vmem:[%s552] sm:$0x1]
      %v794 = vld [vmem:[%s555] sm:$0x1]
      %v795 = vmul.f32 %v790, %v576
      %796 = vadd.xlane.f32.xlu0 %v795
      %v797 = vpop.xlane.xlu0 %796
      %v798 = vmul.f32 %v797, 0.03125
      %v799 = vsub.f32 %v790, %v798
      %v800 = vmul.f32 %v799, %v576
      %v801 = vmul.f32 %v800, %v800
      %802 = vadd.xlane.f32.xlu0 %v801
      %v803 = vpop.xlane.xlu0 %802
      %v804 = vmul.f32 %v803, 0.03125
      %v805 = vadd.f32 %v804, 1e-05
      %v806 = vrsqrt.pop %v805
      %v807 = vmul.f32 %v799, %v806
      %v809 = vlaneseq
      %v810 = vshrl.u32 %v809, 7
      %v811 = vsub.s32 0, %v810
      %v812 = vrot.slane %v793, %v811
      %v814 = vmul.f32 %v807, %v812
      %v816 = vlaneseq
      %v817 = vshrl.u32 %v816, 7
      %v818 = vsub.s32 0, %v817
      %v819 = vrot.slane %v794, %v818
      %v821 = vadd.f32 %v814, %v819
      %v822 = vmax.f32 %v821, 0.0
      %v823 = vld [vmem:[%s560] sm:$0xff]
      %v824 = vld [vmem:[%s560 + $0x8] sm:$0xff]
      %v825 = vld [vmem:[%s560 + $0x10] sm:$0xff]
      %v826 = vld [vmem:[%s560 + $0x18] sm:$0xff]
      %v827 = vld [vmem:[%s560 + $0x20] sm:$0xff]
      %v828 = vld [vmem:[%s560 + $0x28] sm:$0xff]
      %v829 = vld [vmem:[%s560 + $0x30] sm:$0xff]
      %v830 = vld [vmem:[%s560 + $0x38] sm:$0xff]
      %v831 = vld [vmem:[%s560 + $0x40] sm:$0xff]
      %v832 = vld [vmem:[%s560 + $0x48] sm:$0xff]
      %v833 = vld [vmem:[%s560 + $0x50] sm:$0xff]
      %v834 = vld [vmem:[%s560 + $0x58] sm:$0xff]
      %v835 = vld [vmem:[%s560 + $0x60] sm:$0xff]
      %v836 = vld [vmem:[%s560 + $0x68] sm:$0xff]
      %v837 = vld [vmem:[%s560 + $0x70] sm:$0xff]
      %v838 = vld [vmem:[%s560 + $0x78] sm:$0xff]
      %v839 = vld [vmem:[%s563] sm:$0x1]
      %v841 = vlaneseq
      %v842 = vshrl.u32 %v841, 7
      %v843 = vsub.s32 0, %v842
      %v844 = vrot.slane %v839, %v843
      %846 = vmatprep.subr.mxu0 0.0
      %847 = vmatpush1.msra.mxu0 %v838
      %848 = vmatprep.subr.mxu0 0.0
      %849 = vmatpush1.msra.mxu0 %v837
      %850 = vmatprep.subr.mxu0 0.0
      %851 = vmatpush1.msra.mxu0 %v836
      %852 = vmatprep.subr.mxu0 0.0
      %853 = vmatpush1.msra.mxu0 %v835
      %854 = vmatprep.subr.mxu0 0.0
      %855 = vmatpush1.msra.mxu0 %v834
      %856 = vmatprep.subr.mxu0 0.0
      %857 = vmatpush1.msra.mxu0 %v833
      %858 = vmatprep.subr.mxu0 0.0
      %859 = vmatpush1.msra.mxu0 %v832
      %860 = vmatprep.subr.mxu0 0.0
      %861 = vmatpush1.msra.mxu0 %v831
      %862 = vmatprep.subr.mxu0 0.0
      %863 = vmatpush1.msra.mxu0 %v830
      %864 = vmatprep.subr.mxu0 0.0
      %865 = vmatpush1.msra.mxu0 %v829
      %866 = vmatprep.subr.mxu0 0.0
      %867 = vmatpush1.msra.mxu0 %v828
      %868 = vmatprep.subr.mxu0 0.0
      %869 = vmatpush1.msra.mxu0 %v827
      %870 = vmatprep.subr.mxu0 0.0
      %871 = vmatpush1.msra.mxu0 %v826
      %872 = vmatprep.subr.mxu0 0.0
      %873 = vmatpush1.msra.mxu0 %v825
      %874 = vmatprep.subr.mxu0 0.0
      %875 = vmatpush1.msra.mxu0 %v824
      %876 = vmatprep.subr.mxu0 0.0
      %877 = vmatpush1.msra.mxu0 %v823
      %878 = vmatprep.subr.mxu0 0.0
      %879 = vmatpush2.msra.mxu0 0.0
      %880 = vmatprep.subr.mxu0 0.0
      %881 = vmatpush2.msra.mxu0 0.0
      %882 = vmatprep.subr.mxu0 0.0
      %883 = vmatpush2.msra.mxu0 0.0
      %884 = vmatprep.subr.mxu0 0.0
      %885 = vmatpush2.msra.mxu0 0.0
      %886 = vmatprep.subr.mxu0 0.0
      %887 = vmatpush2.msra.mxu0 0.0
      %888 = vmatprep.subr.mxu0 0.0
      %889 = vmatpush2.msra.mxu0 0.0
      %890 = vmatprep.subr.mxu0 0.0
      %891 = vmatpush2.msra.mxu0 0.0
      %892 = vmatprep.subr.mxu0 0.0
      %893 = vmatpush2.msra.mxu0 0.0
      %894 = vmatprep.subr.mxu0 0.0
      %895 = vmatpush2.msra.mxu0 0.0
      %896 = vmatprep.subr.mxu0 0.0
      %897 = vmatpush2.msra.mxu0 0.0
      %898 = vmatprep.subr.mxu0 0.0
      %899 = vmatpush2.msra.mxu0 0.0
      %900 = vmatprep.subr.mxu0 0.0
      %901 = vmatpush2.msra.mxu0 0.0
      %902 = vmatprep.subr.mxu0 0.0
      %903 = vmatpush2.msra.mxu0 0.0
      %904 = vmatprep.subr.mxu0 0.0
      %905 = vmatpush2.msra.mxu0 0.0
      %906 = vmatprep.subr.mxu0 0.0
      %907 = vmatpush2.msra.mxu0 0.0
      %908 = vmatprep.subr.mxu0 0.0
      %909 = vmatpush2.msra.mxu0 0.0
      %910 = vmatprep.mubr.f32.mxu0 0.0
      %911 = vmatmul.mubr.f32.gmra.mxu0 %v822
      %v912 = vpop.f32.mrf.mxu0
      %v913 = vadd.f32 %v844, %v912
      %v914 = vpop.f32.mrf.mxu0
      %915 = vdwg.mxu0
      %v916 = vtanh.pop %v913
      %917 = vst [vmem:[%s570] sm:$0xff] %v916
      %p918 = scmp.lt.s32.totalorder %s26, 1
      %s919 = scalar_select %p918, %s26, 1
      %p920 = scmp.lt.s32.totalorder %s27, 0
      %s921 = scalar_select %p920, %s27, 0
      %s922 = sadd.s32 %s921, %s919
      %s923 = smul.addr %s922, 8
      %s924 = scalar_lea.vmem %s11, %s923
      // Predicated region
      $region65: #{editor_forward.1} parent=63 // pred_check
        %p925 = pneg %p342
      $region66: #{editor_forward.1} parent=63 // pred_check_branch
        %927 = sbr.rel (%p925) target = $region68
      $region67: #{editor_forward.1} parent=63 // pred_region
        _
      $region68: #{editor_forward.1} parent=63 // pred_fallthru
        _
    $region64: #{editor_forward.1} parent=5 // pred_fallthru
      _
    %p928 = scmp.le.s32.totalorder 2, %s17
    // Predicated region
    $region69: #{editor_forward.1} parent=5 // pred_check
      %p929 = pneg %p928
    $region70: #{editor_forward.1} parent=5 // pred_check_branch
      %931 = sbr.rel (%p929) target = $region72
    $region71: #{editor_forward.1} parent=5 // pred_region
      %s932 = ssub.s32 %s17, 2
      // Predicated region
      $region73: #{editor_forward.1} parent=71 // pred_check
        %p933 = pneg %p348
      $region74: #{editor_forward.1} parent=71 // pred_check_branch
        %935 = sbr.rel (%p933) target = $region76
      $region75: #{editor_forward.1} parent=71 // pred_region
        %p936 = scmp.lt.s32.totalorder %s28, 1
        %s937 = scalar_select %p936, %s28, 1
        %p938 = scmp.lt.s32.totalorder %s29, 0
        %s939 = scalar_select %p938, %s29, 0
        %s940 = sadd.s32 %s939, %s937
        %s941 = smul.addr %s940, 8
        %s942 = scalar_lea.vmem %s11, %s941
      $region76: #{editor_forward.1} parent=71 // pred_fallthru
        _
    $region72: #{editor_forward.1} parent=5 // pred_fallthru
      _
  $region6: #{editor_forward.1} parent=0 // loop_footer
    %s21 = sadd.s32 1, %s17
  $region7: #{editor_forward.1} parent=0 // loop_footer_branch
    %16 = sbr.rel target = $region3
  $region8: #{editor_forward.1} parent=0 // loop_exit
    _

</llo_original>
